<compile_context>
chip_gen: v7x
topology: tpu7x:2x2x1
jax: 0.10.0
libtpu: 0.0.40
codegen_flags: <defaults>
</compile_context>

<pallas_src>
import functools

import jax
import jax.numpy as jnp
from jax.experimental import pallas as pl
from jax.experimental.pallas import tpu as pltpu


# ---------------------------------------------------------------------------
# Fused Q(=K)/V projection:  acc = x @ [Wq^T | Wv^T] + [bq | bv]
# One lane-dense 2E-wide matmul; the two halves are written to separate
# (B*N, E) outputs so attention can index head columns directly (no XLA-side
# slice/transpose).
# ---------------------------------------------------------------------------
def _qv_proj_kernel(x_ref, w_ref, b_ref, q_ref, v_ref, *, embed_dim):
    x = x_ref[...].astype(jnp.bfloat16)               # cast in-kernel (hidden)
    acc = jnp.dot(x, w_ref[...], preferred_element_type=jnp.float32)
    acc = acc + b_ref[...]
    q_ref[...] = acc[:, :embed_dim].astype(q_ref.dtype)
    v_ref[...] = acc[:, embed_dim:].astype(v_ref.dtype)


def _qv_projection(x2d, w_qv, b_qv, embed_dim, tm=512):
    """x2d [M, E] f32 ; w_qv [E, 2E] bf16 ; b_qv [1, 2E] f32 -> (q2d, v2d) bf16."""
    M, K = x2d.shape
    F2 = w_qv.shape[1]
    tm = min(tm, M)                                   # tm==M or multiple of 8
    grid_m = pl.cdiv(M, tm)                           # ragged tail handled by Pallas

    return pl.pallas_call(
        functools.partial(_qv_proj_kernel, embed_dim=embed_dim),
        out_shape=(jax.ShapeDtypeStruct((M, embed_dim), jnp.bfloat16),
                   jax.ShapeDtypeStruct((M, embed_dim), jnp.bfloat16)),
        grid_spec=pltpu.PrefetchScalarGridSpec(
            num_scalar_prefetch=0,
            grid=(grid_m,),
            in_specs=[
                pl.BlockSpec((tm, K), lambda i: (i, 0)),   # row tile of x
                pl.BlockSpec((K, F2), lambda i: (0, 0)),   # fused weight, resident
                pl.BlockSpec((1, F2), lambda i: (0, 0)),   # fused bias, resident
            ],
            out_specs=(
                pl.BlockSpec((tm, embed_dim), lambda i: (i, 0)),
                pl.BlockSpec((tm, embed_dim), lambda i: (i, 0)),
            ),
        ),
        compiler_params=pltpu.CompilerParams(
            dimension_semantics=("parallel",),
            vmem_limit_bytes=32 * 1024 * 1024),
    )(x2d, w_qv, b_qv)


# ---------------------------------------------------------------------------
# Generic row-tiled linear (used for the output projection).
# ---------------------------------------------------------------------------
def _linear_kernel(x_ref, w_ref, b_ref, o_ref):
    x = x_ref[...].astype(jnp.bfloat16)
    acc = jnp.dot(x, w_ref[...], preferred_element_type=jnp.float32)
    o_ref[...] = (acc + b_ref[...]).astype(o_ref.dtype)


def _linear(x2d, w, b, out_dtype, tm=512):
    """x2d [M, K] ; w [K, F] bf16 ; b [1, F] f32 -> [M, F] in out_dtype."""
    M, K = x2d.shape
    F = w.shape[1]
    tm = min(tm, M)
    grid_m = pl.cdiv(M, tm)

    return pl.pallas_call(
        _linear_kernel,
        out_shape=jax.ShapeDtypeStruct((M, F), out_dtype),
        grid_spec=pltpu.PrefetchScalarGridSpec(
            num_scalar_prefetch=0,
            grid=(grid_m,),
            in_specs=[
                pl.BlockSpec((tm, K), lambda i: (i, 0)),
                pl.BlockSpec((K, F), lambda i: (0, 0)),
                pl.BlockSpec((1, F), lambda i: (0, 0)),
            ],
            out_specs=pl.BlockSpec((tm, F), lambda i: (i, 0)),
        ),
        compiler_params=pltpu.CompilerParams(
            dimension_semantics=("parallel",),
            vmem_limit_bytes=32 * 1024 * 1024),
    )(x2d, w, b)


# ---------------------------------------------------------------------------
# Attention: per (batch, head-block) tile in the un-transposed (B*N, E) layout.
# key == query (the module uses q_proj for keys).
# ---------------------------------------------------------------------------
def _attn_kernel(q_ref, v_ref, o_ref, aw_ref, *, heads_per_block, head_dim, scale):
    # q_ref / v_ref / o_ref: (N, hpb*Dh) ; aw_ref: (1, hpb, N, N)
    for j in range(heads_per_block):                  # small static unroll
        sl = slice(j * head_dim, (j + 1) * head_dim)
        q = q_ref[:, sl]                              # (N, Dh) bf16, key == query
        v = v_ref[:, sl]                              # (N, Dh) bf16
        s = jax.lax.dot_general(q, q, (((1,), (1,)), ((), ())),
                                preferred_element_type=jnp.float32) * scale
        m = jnp.max(s, axis=-1, keepdims=True)
        p = jnp.exp(s - m)                            # f32 softmax
        inv = pl.reciprocal(jnp.sum(p, axis=-1, keepdims=True), approx=True)
        p = p * inv
        aw_ref[0, j] = p.astype(aw_ref.dtype)
        o_ref[:, sl] = jnp.dot(p.astype(v.dtype), v,
                               preferred_element_type=jnp.float32).astype(o_ref.dtype)


def _choose_heads_per_block(H, Dh, N, budget_bytes=20 * 1024 * 1024):
    """Largest divisor of H giving lane-dense (multiple-of-128, or full-E)
    blocks that fits a conservative VMEM budget (keeps v7x's 64 MiB part safe;
    caps at 2 heads/step for Dh=64 at realistic SigLIP sequence lengths)."""
    def lane_ok(hpb):
        return hpb == H or (hpb * Dh) % 128 == 0

    for hpb in range(H, 0, -1):
        if H % hpb or not lane_ok(hpb):
            continue
        aw_bytes = hpb * N * N * 4 * 2                # f32 attn_w block, 2 buffers
        qvo_bytes = 3 * N * hpb * Dh * 2 * 2          # bf16 q/v/o blocks, 2 buffers
        tmp_bytes = 3 * N * N * 4                     # in-kernel f32 temporaries
        if aw_bytes + qvo_bytes + tmp_bytes <= budget_bytes:
            return hpb
    for hpb in range(1, H + 1):                       # fallback: smallest valid
        if H % hpb == 0 and lane_ok(hpb):
            return hpb
    return 1


def _attention(q2d, v2d, B, N, H, Dh, scale, attn_weights_dtype):
    M, E = q2d.shape
    if B > 1 and N % 8 != 0:
        # Row blocks of size N on a (B*N, E) array need N % 8 == 0.
        raise ValueError(f"sequence length {N} must be a multiple of 8 when B > 1")
    hpb = _choose_heads_per_block(H, Dh, N)
    hd = hpb * Dh

    return pl.pallas_call(
        functools.partial(_attn_kernel, heads_per_block=hpb, head_dim=Dh,
                          scale=scale),
        out_shape=(jax.ShapeDtypeStruct((M, E), jnp.bfloat16),
                   jax.ShapeDtypeStruct((B, H, N, N), attn_weights_dtype)),
        grid_spec=pltpu.PrefetchScalarGridSpec(
            num_scalar_prefetch=0,
            grid=(B, H // hpb),
            in_specs=[
                pl.BlockSpec((N, hd), lambda b, hb: (b, hb)),      # q (== k)
                pl.BlockSpec((N, hd), lambda b, hb: (b, hb)),      # v
            ],
            out_specs=(
                pl.BlockSpec((N, hd), lambda b, hb: (b, hb)),      # attn out
                pl.BlockSpec((1, hpb, N, N), lambda b, hb: (b, hb, 0, 0)),
            ),
        ),
        compiler_params=pltpu.CompilerParams(
            dimension_semantics=("parallel", "parallel"),
            vmem_limit_bytes=32 * 1024 * 1024),
    )(q2d, v2d)


# ---------------------------------------------------------------------------
# One-time parameter prep (hoisted out of the forward path).
# Weights follow nn.Linear layout: W [out_features, in_features], b [out].
# ---------------------------------------------------------------------------
def prepare_siglip_attention_params(wq, bq, wv, bv, wo, bo):
    E = wq.shape[0]
    w_qv = jnp.concatenate([wq.T, wv.T], axis=1).astype(jnp.bfloat16)    # [E, 2E]
    b_qv = jnp.concatenate([bq, bv], axis=0).reshape(1, 2 * E).astype(jnp.float32)
    w_o = wo.T.astype(jnp.bfloat16)                                      # [E, E]
    b_o = bo.reshape(1, E).astype(jnp.float32)
    return {"w_qv": w_qv, "b_qv": b_qv, "w_o": w_o, "b_o": b_o}


def siglip_attention(hidden_states, params, num_heads,
                     attn_weights_dtype=jnp.float32):
    B, N, E = hidden_states.shape
    H = num_heads
    Dh = E // H
    scale = Dh ** -0.5

    x2d = hidden_states.reshape(B * N, E)                      # contiguous, free

    # Fused Q(=K)/V projection -> two (B*N, E) bf16 arrays, no head transpose.
    q2d, v2d = _qv_projection(x2d, params["w_qv"], params["b_qv"], E)

    # Attention over (batch, head-block) grid, reading/writing head columns.
    attn_out, attn_w = _attention(q2d, v2d, B, N, H, Dh, scale,
                                  attn_weights_dtype)

    # Output projection consumes the (B*N, E) attention output directly.
    out = _linear(attn_out, params["w_o"], params["b_o"], out_dtype=jnp.float32)
    return out.reshape(B, N, E), attn_w


# ---------------------------------------------------------------------------
# Pure-JAX f32 reference (mirrors the PyTorch forward, including key = q_proj).
# ---------------------------------------------------------------------------
def _reference(x, wq, bq, wv, bv, wo, bo, num_heads):
    B, N, E = x.shape
    H = num_heads
    Dh = E // H
    scale = Dh ** -0.5
    q = x @ wq.T + bq
    k = x @ wq.T + bq          # module quirk kept: keys come from q_proj
    v = x @ wv.T + bv

    def split(t):
        return t.reshape(B, N, H, Dh).transpose(0, 2, 1, 3)

    q, k, v = split(q), split(k), split(v)
    s = jnp.einsum("bhqd,bhkd->bhqk", q, k) * scale
    p = jax.nn.softmax(s.astype(jnp.float32), axis=-1)
    o = jnp.einsum("bhqk,bhkd->bhqd", p, v)
    o = o.transpose(0, 2, 1, 3).reshape(B, N, E)
    o = o @ wo.T + bo
    return o, p


if __name__ == "__main__":
    # Small config consistent with the module: hidden=32, heads=4 (head_dim=8),
    # batch=2, num_patches(seq)=16.
    batch, seq, hidden, num_heads = 2, 16, 32, 4

    key = jax.random.PRNGKey(0)
    kx, kq, kbq, kk, kbk, kv, kbv, ko, kbo = jax.random.split(key, 9)

    x = jax.random.normal(kx, (batch, seq, hidden), dtype=jnp.float32)
    wq = jax.random.normal(kq, (hidden, hidden), dtype=jnp.float32) * 0.05
    bq = jax.random.normal(kbq, (hidden,), dtype=jnp.float32) * 0.05
    # k_proj parameters exist in the module but are unused by its forward
    # (key_states = q_proj(hidden_states)); created here only for fidelity.
    wk = jax.random.normal(kk, (hidden, hidden), dtype=jnp.float32) * 0.05
    bk = jax.random.normal(kbk, (hidden,), dtype=jnp.float32) * 0.05
    wv = jax.random.normal(kv, (hidden, hidden), dtype=jnp.float32) * 0.05
    bv = jax.random.normal(kbv, (hidden,), dtype=jnp.float32) * 0.05
    wo = jax.random.normal(ko, (hidden, hidden), dtype=jnp.float32) * 0.05
    bo = jax.random.normal(kbo, (hidden,), dtype=jnp.float32) * 0.05

    params = prepare_siglip_attention_params(wq, bq, wv, bv, wo, bo)

    out, attn_w = siglip_attention(x, params, num_heads)
    out = jax.block_until_ready(out)
    attn_w = jax.block_until_ready(attn_w)

    ref_out, ref_w = _reference(x, wq, bq, wv, bv, wo, bo, num_heads)

    assert out.shape == (batch, seq, hidden), out.shape
    assert attn_w.shape == (batch, num_heads, seq, seq), attn_w.shape
    # bf16 MXU operands + approx reciprocal -> loose tolerance vs f32 reference.
    assert jnp.allclose(out, ref_out, atol=2e-2, rtol=2e-2), "output mismatch"
    assert jnp.allclose(attn_w, ref_w, atol=2e-2, rtol=2e-2), "attn weights mismatch"

    print("KERNEL_OK")
</pallas_src>

<mosaic_0001>
module attributes {stable_mosaic.version = 11 : i64} {
  func.func @_qv_proj_kernel(%arg0: i32, %arg1: memref<32x32xf32, #tpu.memory_space<vmem>>, %arg2: memref<32x64xbf16, #tpu.memory_space<vmem>>, %arg3: memref<1x64xf32, #tpu.memory_space<vmem>>, %arg4: memref<32x32xbf16, #tpu.memory_space<vmem>>, %arg5: memref<32x32xbf16, #tpu.memory_space<vmem>>) attributes {dimension_semantics = [#tpu.dimension_semantics<parallel>], iteration_bounds = array<i64: 1>, scalar_prefetch = 0 : i64, scratch_operands = 0 : i64, tpu.core_type = #tpu.core_type<tc>, window_params = [{transform_indices = @transform_0, window_bounds = array<i64: 32, 32>}, {pipeline_mode = #tpu.pipeline_mode<synchronous>, transform_indices = @transform_1, window_bounds = array<i64: 32, 64>}, {pipeline_mode = #tpu.pipeline_mode<synchronous>, transform_indices = @transform_2, window_bounds = array<i64: 1, 64>}, {transform_indices = @transform_3, window_bounds = array<i64: 32, 32>}, {transform_indices = @transform_4, window_bounds = array<i64: 32, 32>}]} {
    %c0 = arith.constant 0 : index
    %c0_0 = arith.constant 0 : index
    %0 = vector.load %arg1[%c0, %c0_0] : memref<32x32xf32, #tpu.memory_space<vmem>>, vector<32x32xf32>
    %1 = arith.truncf %0 : vector<32x32xf32> to vector<32x32xbf16>
    %c0_1 = arith.constant 0 : index
    %c0_2 = arith.constant 0 : index
    %2 = vector.load %arg2[%c0_1, %c0_2] : memref<32x64xbf16, #tpu.memory_space<vmem>>, vector<32x64xbf16>
    %cst = arith.constant dense<0.000000e+00> : vector<32x64xf32>
    %3 = tpu.matmul %1, %2, %cst {dimension_numbers = #tpu.dot_dimension_numbers<[1], [0], [0], [1], [0, 0, 1, 1], [], []>} : vector<32x32xbf16>, vector<32x64xbf16>, vector<32x64xf32> -> vector<32x64xf32>
    %c0_3 = arith.constant 0 : index
    %c0_4 = arith.constant 0 : index
    %4 = vector.load %arg3[%c0_3, %c0_4] : memref<1x64xf32, #tpu.memory_space<vmem>>, vector<1x64xf32>
    %5 = vector.broadcast %4 : vector<1x64xf32> to vector<32x64xf32>
    %6 = arith.addf %3, %5 : vector<32x64xf32>
    %7 = vector.extract_strided_slice %6 {offsets = [0, 0], sizes = [32, 32], strides = [1, 1]} : vector<32x64xf32> to vector<32x32xf32>
    %8 = arith.truncf %7 : vector<32x32xf32> to vector<32x32xbf16>
    %c0_5 = arith.constant 0 : index
    %c0_6 = arith.constant 0 : index
    %9 = vector.load %arg4[%c0_5, %c0_6] : memref<32x32xbf16, #tpu.memory_space<vmem>>, vector<32x32xbf16>
    tpu.vector_store %arg4[%c0_5, %c0_6], %8 {strides = array<i32>} : memref<32x32xbf16, #tpu.memory_space<vmem>>, vector<32x32xbf16>,
    %10 = vector.extract_strided_slice %6 {offsets = [0, 32], sizes = [32, 32], strides = [1, 1]} : vector<32x64xf32> to vector<32x32xf32>
    %11 = arith.truncf %10 : vector<32x32xf32> to vector<32x32xbf16>
    %c0_7 = arith.constant 0 : index
    %c0_8 = arith.constant 0 : index
    %12 = vector.load %arg5[%c0_7, %c0_8] : memref<32x32xbf16, #tpu.memory_space<vmem>>, vector<32x32xbf16>
    tpu.vector_store %arg5[%c0_7, %c0_8], %11 {strides = array<i32>} : memref<32x32xbf16, #tpu.memory_space<vmem>>, vector<32x32xbf16>,
    return
  }
  func.func @transform_0(%arg0: i32) -> (i32, i32) {
    %c0_i32 = arith.constant 0 : i32
    %c0_i32_0 = arith.constant 0 : i32
    return %arg0, %c0_i32 : i32, i32
  }
  func.func @transform_1(%arg0: i32) -> (i32, i32) {
    %c0_i32 = arith.constant 0 : i32
    %c0_i32_0 = arith.constant 0 : i32
    %c0_i32_1 = arith.constant 0 : i32
    return %c0_i32, %c0_i32_0 : i32, i32
  }
  func.func @transform_2(%arg0: i32) -> (i32, i32) {
    %c0_i32 = arith.constant 0 : i32
    %c0_i32_0 = arith.constant 0 : i32
    %c0_i32_1 = arith.constant 0 : i32
    return %c0_i32, %c0_i32_0 : i32, i32
  }
  func.func @transform_3(%arg0: i32) -> (i32, i32) {
    %c0_i32 = arith.constant 0 : i32
    %c0_i32_0 = arith.constant 0 : i32
    return %arg0, %c0_i32 : i32, i32
  }
  func.func @transform_4(%arg0: i32) -> (i32, i32) {
    %c0_i32 = arith.constant 0 : i32
    %c0_i32_0 = arith.constant 0 : i32
    return %arg0, %c0_i32 : i32, i32
  }
}

</mosaic_0001>

<llo_original>
// kernel: tpu_custom_call.1
$region0: #{tpu_custom_call.1}
  #allocation0 [shape = 'u32[]', space=smem, size = 0x4, offset = 0x4, fixed_abs, tag = 'smem constant byte address 0x4 - core index']
  #allocation1 [shape = 'u32[144,128]{1,0:T(1,128)}', space=vmem, size = 0x12000, scoped, tag = 'internal scratch']
  %s0 = inlined_call_operand.hbm [shape: f32[32,32], index: 0, kind: input, shape index: {}]
  %s1 = inlined_call_operand.hbm [shape: bf16[32,64], index: 1, kind: input, shape index: {}]
  %s2 = inlined_call_operand.vmem [shape: f32[1,64], index: 2, kind: input, shape index: {}]
  %s3 = inlined_call_operand.hbm [shape: bf16[32,32], index: 3, kind: output, shape index: {0}]
  %s4 = inlined_call_operand.hbm [shape: bf16[32,32], index: 4, kind: output, shape index: {1}]
  %5 = xla_tuple %s3, %s4
  %s6 = sld [smem:[#allocation0]]
  $region38: #{tpu_custom_call.1} parent=0
    _
  %s8 = ssub.s32 1, %s6
  %s9 = scalar_select 0, %s8, %s6
  $region1: #{tpu_custom_call.1} parent=0
    #allocation2 [shape = 'u8[16384]{0}', space=vmem, size = 0x4000, scoped, tag = 'input window, operand 0, single buffered']
    #allocation3 [shape = 's32[1]{0}', space=sflag, size = 0x4, scoped, tag = 'scoped memory for tpu_custom_call.1']
    #allocation4 [shape = 's32[1]{0}', space=sflag, size = 0x4, scoped, tag = 'scoped memory for tpu_custom_call.1']
    #allocation5 [shape = 'u8[8192]{0}', space=vmem, size = 0x2000, scoped, tag = 'input window, operand 1, single buffered']
    #allocation6 [shape = 's32[1]{0}', space=sflag, size = 0x4, scoped, tag = 'scoped memory for tpu_custom_call.1']
    #allocation7 [shape = 'u8[8192]{0}', space=vmem, size = 0x2000, scoped, tag = 'output window, operand 0, single buffered']
    #allocation8 [shape = 'u8[8192]{0}', space=vmem, size = 0x2000, scoped, tag = 'output window, operand 1, single buffered']
    #allocation9 [shape = 's32[1]{0}', space=sflag, size = 0x4, scoped, tag = 'scoped memory for tpu_custom_call.1']
    %10 = vsyncpa [#allocation3], 0
    %11 = vsyncpa [#allocation6], 0
    %12 = vsyncpa [#allocation4], 0
    %13 = vsyncpa [#allocation9], 0
    // Predicated region
    $region2: #{tpu_custom_call.1} parent=1 // pred_check
      _
    $region3: #{tpu_custom_call.1} parent=1 // pred_check_branch
      %15 = sbr.rel (0) target = $region5
    $region4: #{tpu_custom_call.1} parent=1 // pred_region
      %s17 = ssub.s32 512, 512
      %18 = vsyncadd [#allocation3], %s17
      %s19 = sshll.u32 [#allocation2], 4
      %s20 = int_to_ptr.vmem [resolvable:$true] %s19
      %25 = dma.hbm_to_vmem [thread:$0]  %s0, 512, %s20, [#allocation3], 128, 128, 8
    $region5: #{tpu_custom_call.1} parent=1 // pred_fallthru
      _
    // Predicated region
    $region6: #{tpu_custom_call.1} parent=1 // pred_check
      _
    $region7: #{tpu_custom_call.1} parent=1 // pred_check_branch
      %27 = sbr.rel (0) target = $region9
    $region8: #{tpu_custom_call.1} parent=1 // pred_region
      %s29 = ssub.s32 256, 256
      %30 = vsyncadd [#allocation6], %s29
      %s31 = sshll.u32 [#allocation5], 4
      %s32 = int_to_ptr.vmem [resolvable:$true] %s31
      %37 = dma.hbm_to_vmem [thread:$0]  %s1, 256, %s32, [#allocation6], 64, 64, 4
    $region9: #{tpu_custom_call.1} parent=1 // pred_fallthru
      _
    // Predicated region
    $region10: #{tpu_custom_call.1} parent=1 // pred_check
      _
    $region11: #{tpu_custom_call.1} parent=1 // pred_check_branch
      %39 = sbr.rel (0) target = $region13
    $region12: #{tpu_custom_call.1} parent=1 // pred_region
      _
    $region13: #{tpu_custom_call.1} parent=1 // pred_fallthru
      _
    // Predicated region
    $region14: #{tpu_custom_call.1} parent=1 // pred_check
      _
    $region15: #{tpu_custom_call.1} parent=1 // pred_check_branch
      %41 = sbr.rel (0) target = $region17
    $region16: #{tpu_custom_call.1} parent=1 // pred_region
      %42 = dma.done [#allocation3], 512
    $region17: #{tpu_custom_call.1} parent=1 // pred_fallthru
      _
    // Predicated region
    $region18: #{tpu_custom_call.1} parent=1 // pred_check
      _
    $region19: #{tpu_custom_call.1} parent=1 // pred_check_branch
      %44 = sbr.rel (0) target = $region21
    $region20: #{tpu_custom_call.1} parent=1 // pred_region
      %45 = dma.done [#allocation6], 256
    $region21: #{tpu_custom_call.1} parent=1 // pred_fallthru
      _
    %v47 = vld [vmem:[#allocation2] sm:$0xff]
    %v48 = vld [vmem:[#allocation2 + $0x8] sm:$0xff]
    %v49 = vld [vmem:[#allocation2 + $0x10] sm:$0xff]
    %v50 = vld [vmem:[#allocation2 + $0x18] sm:$0xff]
    %v51 = vpack.c.bf16 %v48, %v47
    %v52 = vpack.c.bf16 %v50, %v49
    %v53 = vld [vmem:[#allocation5] sm:$0xf]
    %v54 = vld [vmem:[#allocation5 + $0x4] sm:$0xf]
    %v55 = vld [vmem:[#allocation5 + $0x8] sm:$0xf]
    %v56 = vld [vmem:[#allocation5 + $0xc] sm:$0xf]
    %v57 = vld [vmem:[%s2] sm:$0x1]
    %v59 = vlaneseq
    %v60 = vshrl.u32 %v59, 7
    %v61 = vsub.s32 0, %v60
    %v62 = vrot.slane %v57, %v61
    %v68 = vunpack.c.l.b16 %v53
    %v69 = vunpack.c.l.b16 %v54
    %v70 = vunpack.c.l.b16 %v55
    %v71 = vunpack.c.l.b16 %v56
    %v72 = vpack.c.b16 %v69, %v68
    %v73 = vpack.c.b16 %v71, %v70
    %vm76 = vcmask 261120
    %v78 = vsel %vm76, %v51, 0
    %v81 = vsel %vm76, %v52, 0
    %83 = vmatprep.subr.bf16.mxu0 0
    %84 = vmatpush1.bf16.msra.mxu0 %v72
    %85 = vmatprep.subr.bf16.mxu0 0
    %86 = vmatpush1.bf16.msra.mxu0 %v73
    %87 = vmatprep.subr.bf16.mxu0 0
    %88 = vmatpush1.bf16.msra.mxu0 0
    %89 = vmatprep.subr.bf16.mxu0 0
    %90 = vmatpush1.bf16.msra.mxu0 0
    %91 = vmatprep.subr.bf16.mxu0 0
    %92 = vmatpush1.bf16.msra.mxu0 0
    %93 = vmatprep.subr.bf16.mxu0 0
    %94 = vmatpush1.bf16.msra.mxu0 0
    %95 = vmatprep.subr.bf16.mxu0 0
    %96 = vmatpush1.bf16.msra.mxu0 0
    %97 = vmatprep.subr.bf16.mxu0 0
    %98 = vmatpush1.bf16.msra.mxu0 0
    %99 = vmatprep.subr.bf16.mxu0 0
    %100 = vmatpush1.bf16.msra.mxu0 0
    %101 = vmatprep.subr.bf16.mxu0 0
    %102 = vmatpush1.bf16.msra.mxu0 0
    %103 = vmatprep.subr.bf16.mxu0 0
    %104 = vmatpush1.bf16.msra.mxu0 0
    %105 = vmatprep.subr.bf16.mxu0 0
    %106 = vmatpush1.bf16.msra.mxu0 0
    %107 = vmatprep.subr.bf16.mxu0 0
    %108 = vmatpush1.bf16.msra.mxu0 0
    %109 = vmatprep.subr.bf16.mxu0 0
    %110 = vmatpush1.bf16.msra.mxu0 0
    %111 = vmatprep.subr.bf16.mxu0 0
    %112 = vmatpush1.bf16.msra.mxu0 0
    %113 = vmatprep.subr.bf16.mxu0 0
    %114 = vmatpush1.bf16.msra.mxu0 0
    %115 = vmatprep.mubr.bf16.mxu0 0
    %116 = vmatmul.mubr.bf16.gmra.mrb[0].mxu0 %v78
    %v117 = vpop.f32.mrb[0].mxu0
    %v118 = vadd.f32 %v62, %v117
    %v119 = vpop.f32.mrb[0].mxu0
    %v120 = vpop.f32.mrb[0].mxu0
    %v121 = vadd.f32 %v62, %v120
    %v122 = vpop.f32.mrb[0].mxu0
    %123 = vmatprep.mubr.bf16.mxu0 0
    %124 = vmatmul.mubr.bf16.gmra.mrb[0].mxu0 %v81
    %v125 = vpop.f32.mrb[0].mxu0
    %v126 = vadd.f32 %v62, %v125
    %v127 = vpop.f32.mrb[0].mxu0
    %v128 = vpop.f32.mrb[0].mxu0
    %v129 = vadd.f32 %v62, %v128
    %v130 = vpop.f32.mrb[0].mxu0
    %131 = vdwg.mxu0
    %v132 = vpack.c.bf16 %v121, %v118
    %v133 = vpack.c.bf16 %v129, %v126
    %v136 = vunpack.c.l.b16 %v132
    %v137 = vunpack.c.h.b16 %v132
    %v138 = vunpack.c.l.b16 %v133
    %v139 = vunpack.c.h.b16 %v133
    %v140 = vpack.c.b16 %v136, %v136
    %v141 = vpack.c.b16 %v137, %v137
    %v142 = vpack.c.b16 %v138, %v138
    %v143 = vpack.c.b16 %v139, %v139
    %vm148 = vcmask 257024
    %149 = vst.msk [vmem:[#allocation7] sm:$0xf] %vm148, %v140
    %150 = vst.msk [vmem:[#allocation7 + $0x4] sm:$0xf] %vm148, %v141
    %151 = vst.msk [vmem:[#allocation7 + $0x8] sm:$0xf] %vm148, %v142
    %152 = vst.msk [vmem:[#allocation7 + $0xc] sm:$0xf] %vm148, %v143
    %153 = vrot.lane.b32.xlu0 %v140, 96
    %v154 = vpop.permute.xlu0 %153
    %155 = vrot.lane.b32.xlu0 %v141, 96
    %v156 = vpop.permute.xlu0 %155
    %157 = vrot.lane.b32.xlu0 %v142, 96
    %v158 = vpop.permute.xlu0 %157
    %159 = vrot.lane.b32.xlu0 %v143, 96
    %v160 = vpop.permute.xlu0 %159
    %165 = vst.msk [vmem:[#allocation8] sm:$0xf] %vm148, %v154
    %166 = vst.msk [vmem:[#allocation8 + $0x4] sm:$0xf] %vm148, %v156
    %167 = vst.msk [vmem:[#allocation8 + $0x8] sm:$0xf] %vm148, %v158
    %168 = vst.msk [vmem:[#allocation8 + $0xc] sm:$0xf] %vm148, %v160
    // Predicated region
    $region22: #{tpu_custom_call.1} parent=1 // pred_check
      _
    $region23: #{tpu_custom_call.1} parent=1 // pred_check_branch
      %170 = sbr.rel (0) target = $region25
    $region24: #{tpu_custom_call.1} parent=1 // pred_region
      %s172 = ssub.s32 256, 256
      %173 = vsyncadd [#allocation4], %s172
      %s174 = sshll.u32 [#allocation7], 4
      %s175 = int_to_ptr.vmem [resolvable:$true] %s174
      %180 = dma.vmem_to_hbm [thread:$0]  %s175, 256, %s3, [#allocation4], 64, 64, 4
    $region25: #{tpu_custom_call.1} parent=1 // pred_fallthru
      _
    // Predicated region
    $region26: #{tpu_custom_call.1} parent=1 // pred_check
      _
    $region27: #{tpu_custom_call.1} parent=1 // pred_check_branch
      %182 = sbr.rel (0) target = $region29
    $region28: #{tpu_custom_call.1} parent=1 // pred_region
      %s184 = ssub.s32 256, 256
      %185 = vsyncadd [#allocation9], %s184
      %s186 = sshll.u32 [#allocation8], 4
      %s187 = int_to_ptr.vmem [resolvable:$true] %s186
      %192 = dma.vmem_to_hbm [thread:$0]  %s187, 256, %s4, [#allocation9], 64, 64, 4
    $region29: #{tpu_custom_call.1} parent=1 // pred_fallthru
      _
    // Predicated region
    $region30: #{tpu_custom_call.1} parent=1 // pred_check
      _
    $region31: #{tpu_custom_call.1} parent=1 // pred_check_branch
      %194 = sbr.rel (0) target = $region33
    $region32: #{tpu_custom_call.1} parent=1 // pred_region
      %195 = dma.done [#allocation4], 256
    $region33: #{tpu_custom_call.1} parent=1 // pred_fallthru
      _
    // Predicated region
    $region34: #{tpu_custom_call.1} parent=1 // pred_check
      _
    $region35: #{tpu_custom_call.1} parent=1 // pred_check_branch
      %197 = sbr.rel (0) target = $region37
    $region36: #{tpu_custom_call.1} parent=1 // pred_region
      %198 = dma.done [#allocation9], 256
    $region37: #{tpu_custom_call.1} parent=1 // pred_fallthru
      _
    %199 = vsyncpa [#allocation3], 1
    %200 = vsyncpa [#allocation6], 1
    %201 = vsyncpa [#allocation4], 1
    %202 = vsyncpa [#allocation9], 1

</llo_original>
